<compile_context>
chip_gen: v7x
topology: tpu7x:2x2x1
jax: 0.10.0
libtpu: 0.0.40
codegen_flags: <defaults>
</compile_context>

<pallas_src>
import math

import jax
import jax.numpy as jnp
import numpy as np
from jax import lax
from jax.experimental import pallas as pl
from jax.experimental.pallas import tpu as pltpu

IN_SIZE = 4          # in_size
NUM_NODES = 6        # len(nodes)
OUT_SIZE = 2         # out_size (last OUT_SIZE nodes have is_output=True)
MAX_CTX = 8          # max_context_length -> T
NUM_IN_KEYS = 3      # len(in_keys) per node
TOTAL = IN_SIZE + NUM_NODES + OUT_SIZE  # C = 12


def attention_net_kernel(hist_ref, x_ref, w_ref, out_ref):
    """One invocation = one AttentionNeNet.activate step; node loop statically unrolled."""
    H = MAX_CTX - 1                      # number of (immutable) history rows
    N = NUM_NODES
    C = TOTAL

    hist = hist_ref[...]                 # (H, C)  f32
    x_row = x_ref[...]                   # (1, IN_SIZE)
    W = w_ref[...]                       # (C, 3N): columns [q_0..q_{N-1} | k_0.. | v_0..]

    # --------------- hoisted precompute (all OFF the serial node chain) ---------------
    # qkv_hist[t, :] = hist[t, :] @ W, as a stacked outer-product accumulation over the
    # C feature columns: pure VPU broadcast-FMAs, exact f32, identical on v5e/v6e/v7x.
    qkv_hist = hist[:, 0:1] * W[0:1, :]                                  # (H, 3N)
    for c in range(1, C):
        qkv_hist = qkv_hist + hist[:, c:c + 1] * W[c:c + 1, :]

    # Initial last-row projections: the fresh last row is [x, 0, ..., 0], so only the
    # first IN_SIZE feature columns contribute.
    qkv_last = x_row[:, 0:1] * W[0:1, :]                                 # (1, 3N)
    for c in range(1, IN_SIZE):
        qkv_last = qkv_last + x_row[:, c:c + 1] * W[c:c + 1, :]

    # Loop-invariant per-node pieces (all lane extractions done once, before the chain).
    lane2 = lax.broadcasted_iota(jnp.int32, (H, 2), 1)
    k_hist = [qkv_hist[:, N + n:N + n + 1] for n in range(N)]            # (H, 1) each
    v1_hist = [jnp.where(lane2 == 0,
                         jnp.broadcast_to(qkv_hist[:, 2 * N + n:2 * N + n + 1], (H, 2)),
                         1.0)
               for n in range(N)]                                        # (H, 2) = [v | 1]
    w_fb = [W[IN_SIZE + j:IN_SIZE + j + 1, :] for j in range(N)]         # (1, 3N) feedback rows

    # --------------- outputs that do not depend on the chain --------------------------
    out_ref[0:H, :] = hist                                               # history rows verbatim
    out_ref[H:H + 1, 0:IN_SIZE] = x_row                                  # new row: inputs
    out_ref[H:H + 1, IN_SIZE + N:C] = jnp.zeros((1, OUT_SIZE), jnp.float32)  # out-tail stays 0

    # --------------- serial node chain -------------------------------------------------
    # Per node, only scalar/short-vector VPU work, two EUP exps, one EUP tanh, one exact
    # divide and a single (H,2) sublane reduce remain on the dependency chain.
    for n in range(N):
        q_l = qkv_last[:, n:n + 1]                        # (1,1) last-row q
        k_l = qkv_last[:, N + n:N + n + 1]                # (1,1) last-row k
        v_l = qkv_last[:, 2 * N + n:2 * N + n + 1]        # (1,1) last-row v

        # Last attention row only; d_k == 1 so the 1/sqrt(d_k) scale is exactly 1.
        lg_h = q_l * k_hist[n]                                            # (H, 1)
        lg_l = q_l * k_l                                                  # (1, 1)
        m = jnp.maximum(jnp.max(lg_h, axis=0, keepdims=True), lg_l)       # (1, 1)
        e_h = jnp.exp(lg_h - m)                                           # (H, 1) EUP
        e_l = jnp.exp(lg_l - m)                                           # (1, 1) EUP
        # Fused numerator/denominator: ONE sublane reduce of e * [v | 1].
        sums = jnp.sum(e_h * v1_hist[n], axis=0, keepdims=True)           # (1, 2)
        num = sums[:, 0:1] + e_l * v_l
        den = sums[:, 1:2] + e_l
        o = jnp.tanh(num / den)                                           # (1, 1), exact divide
        # TODO(synk): arbitrary per-node Python `activation` callables are not
        #             expressible inside one kernel; all nodes use tanh here.

        # actives[-1, IN_SIZE + n] = o   (direct scalar store, off the compute chain)
        out_ref[H:H + 1, IN_SIZE + n:IN_SIZE + n + 1] = o

        # Incremental last-row update for the still-pending nodes: the actives last row
        # gains o in column IN_SIZE + n, so every last-row projection gains
        # o * W[IN_SIZE + n, :].  Pure (1, 3N) VPU FMA -- no reduction on the chain.
        if n + 1 < N:
            qkv_last = qkv_last + o * w_fb[n]


@jax.jit
def attention_ne_net_forward(history, x, w_eff):
    """Mirrors AttentionNeNet.activate(x) with a full (T-1, C) context history.

    history : (T-1, C) previous actives rows (immutable within this step)
    x       : (IN_SIZE,) new input
    w_eff   : (N, C, 3) per-node effective weights (column gather folded in by linearity)
    Returns (net_output[OUT_SIZE], new_actives[T, C]).
    """
    history = history.astype(jnp.float32)
    x_row = x.astype(jnp.float32).reshape(1, IN_SIZE)
    # Single 2-D weight slab (one contiguous DMA): columns [q_0..q_{N-1} | k_0.. | v_0..].
    w_slab = jnp.transpose(w_eff.astype(jnp.float32), (1, 2, 0)).reshape(
        TOTAL, 3 * NUM_NODES)

    actives_out = pl.pallas_call(
        attention_net_kernel,
        out_shape=jax.ShapeDtypeStruct((MAX_CTX, TOTAL), jnp.float32),
        in_specs=[
            pl.BlockSpec(memory_space=pltpu.MemorySpace.VMEM),   # history (whole array)
            pl.BlockSpec(memory_space=pltpu.MemorySpace.VMEM),   # x row
            pl.BlockSpec(memory_space=pltpu.MemorySpace.VMEM),   # weight slab
        ],
        out_specs=pl.BlockSpec(memory_space=pltpu.MemorySpace.VMEM),
    )(history, x_row, w_slab)

    # is_output nodes are the last OUT_SIZE nodes; their activations live in the last row.
    net_out = actives_out[MAX_CTX - 1,
                          IN_SIZE + NUM_NODES - OUT_SIZE: IN_SIZE + NUM_NODES]
    return net_out, actives_out


def reference_forward(history, x, w_eff):
    """Pure-NumPy float32 reference, literal transcription of the PyTorch forward."""
    history = np.asarray(history, np.float32)
    x = np.asarray(x, np.float32)
    w_eff = np.asarray(w_eff, np.float32)
    A = np.zeros((MAX_CTX, TOTAL), np.float32)
    A[:MAX_CTX - 1] = history
    A[MAX_CTX - 1, :IN_SIZE] = x
    outs = []
    for n in range(NUM_NODES):
        qkv = A @ w_eff[n]                              # == index_select(...) @ weights
        q, k, v = qkv[:, 0:1], qkv[:, 1:2], qkv[:, 2:3]
        logits = (q @ k.T) / math.sqrt(q.shape[-1])     # d_k == 1
        logits = logits - logits.max(axis=-1, keepdims=True)
        attn = np.exp(logits)
        attn = attn / attn.sum(axis=-1, keepdims=True)
        values = attn @ v
        o = np.tanh(values[-1, 0])
        A[MAX_CTX - 1, IN_SIZE + n] = o
        outs.append(o)
    outs = np.asarray(outs, np.float32)
    return outs[NUM_NODES - OUT_SIZE:], A


if __name__ == "__main__":
    key = jax.random.PRNGKey(0)
    k_w, k_hist, k_x, *k_idx = jax.random.split(key, 3 + NUM_NODES)

    # AttentionNeNode.__init__: weights = randn(len(in_keys), 3); in_idxs drawn from the
    # inputs and previously-declared nodes.  Fold the column gather + (K,3) matmul into
    # an exact per-node (C,3) scattered "effective" weight.
    node_weights = jax.random.normal(k_w, (NUM_NODES, NUM_IN_KEYS, 3), jnp.float32)
    w_eff = jnp.zeros((NUM_NODES, TOTAL, 3), jnp.float32)
    for ix in range(NUM_NODES):
        idx = jax.random.choice(k_idx[ix], IN_SIZE + ix, shape=(NUM_IN_KEYS,),
                                replace=False)
        w_eff = w_eff.at[ix, idx, :].add(node_weights[ix])

    # Synthetic prior context (T-1 previous rows of the actives buffer) + new input x.
    history = 0.1 * jax.random.normal(k_hist, (MAX_CTX - 1, TOTAL), jnp.float32)
    x = jax.random.normal(k_x, (IN_SIZE,), jnp.float32)

    net_out, new_actives = attention_ne_net_forward(history, x, w_eff)
    net_out = jax.block_until_ready(net_out)
    new_actives = jax.block_until_ready(new_actives)

    ref_out, ref_actives = reference_forward(history, x, w_eff)
    # Exact softmax normalisation (no approximate reciprocal) restores tight agreement;
    # remaining slack only covers f32 accumulation-order / EUP exp-tanh ULP differences.
    np.testing.assert_allclose(np.asarray(net_out), ref_out, rtol=1e-4, atol=1e-4)
    np.testing.assert_allclose(np.asarray(new_actives), ref_actives, rtol=1e-4, atol=1e-4)

    print("KERNEL_OK")
</pallas_src>

<mosaic_0001>
module attributes {stable_mosaic.version = 11 : i64} {
  func.func @attention_net_kernel(%arg0: memref<7x12xf32, #tpu.memory_space<vmem>>, %arg1: memref<1x4xf32, #tpu.memory_space<vmem>>, %arg2: memref<12x18xf32, #tpu.memory_space<vmem>>, %arg3: memref<8x12xf32, #tpu.memory_space<vmem>>) attributes {dimension_semantics = [], scalar_prefetch = 0 : i64, scratch_operands = 0 : i64, tpu.core_type = #tpu.core_type<tc>} {
    %c0 = arith.constant 0 : index
    %c0_0 = arith.constant 0 : index
    %0 = vector.load %arg0[%c0, %c0_0] : memref<7x12xf32, #tpu.memory_space<vmem>>, vector<7x12xf32>
    %c0_1 = arith.constant 0 : index
    %c0_2 = arith.constant 0 : index
    %1 = vector.load %arg1[%c0_1, %c0_2] : memref<1x4xf32, #tpu.memory_space<vmem>>, vector<1x4xf32>
    %c0_3 = arith.constant 0 : index
    %c0_4 = arith.constant 0 : index
    %2 = vector.load %arg2[%c0_3, %c0_4] : memref<12x18xf32, #tpu.memory_space<vmem>>, vector<12x18xf32>
    %3 = vector.extract_strided_slice %0 {offsets = [0, 0], sizes = [7, 1], strides = [1, 1]} : vector<7x12xf32> to vector<7x1xf32>
    %4 = vector.extract_strided_slice %2 {offsets = [0, 0], sizes = [1, 18], strides = [1, 1]} : vector<12x18xf32> to vector<1x18xf32>
    %5 = vector.broadcast %3 : vector<7x1xf32> to vector<7x18xf32>
    %6 = vector.broadcast %4 : vector<1x18xf32> to vector<7x18xf32>
    %7 = arith.mulf %5, %6 : vector<7x18xf32>
    %8 = vector.extract_strided_slice %0 {offsets = [0, 1], sizes = [7, 1], strides = [1, 1]} : vector<7x12xf32> to vector<7x1xf32>
    %9 = vector.extract_strided_slice %2 {offsets = [1, 0], sizes = [1, 18], strides = [1, 1]} : vector<12x18xf32> to vector<1x18xf32>
    %10 = vector.broadcast %8 : vector<7x1xf32> to vector<7x18xf32>
    %11 = vector.broadcast %9 : vector<1x18xf32> to vector<7x18xf32>
    %12 = arith.mulf %10, %11 : vector<7x18xf32>
    %13 = arith.addf %7, %12 : vector<7x18xf32>
    %14 = vector.extract_strided_slice %0 {offsets = [0, 2], sizes = [7, 1], strides = [1, 1]} : vector<7x12xf32> to vector<7x1xf32>
    %15 = vector.extract_strided_slice %2 {offsets = [2, 0], sizes = [1, 18], strides = [1, 1]} : vector<12x18xf32> to vector<1x18xf32>
    %16 = vector.broadcast %14 : vector<7x1xf32> to vector<7x18xf32>
    %17 = vector.broadcast %15 : vector<1x18xf32> to vector<7x18xf32>
    %18 = arith.mulf %16, %17 : vector<7x18xf32>
    %19 = arith.addf %13, %18 : vector<7x18xf32>
    %20 = vector.extract_strided_slice %0 {offsets = [0, 3], sizes = [7, 1], strides = [1, 1]} : vector<7x12xf32> to vector<7x1xf32>
    %21 = vector.extract_strided_slice %2 {offsets = [3, 0], sizes = [1, 18], strides = [1, 1]} : vector<12x18xf32> to vector<1x18xf32>
    %22 = vector.broadcast %20 : vector<7x1xf32> to vector<7x18xf32>
    %23 = vector.broadcast %21 : vector<1x18xf32> to vector<7x18xf32>
    %24 = arith.mulf %22, %23 : vector<7x18xf32>
    %25 = arith.addf %19, %24 : vector<7x18xf32>
    %26 = vector.extract_strided_slice %0 {offsets = [0, 4], sizes = [7, 1], strides = [1, 1]} : vector<7x12xf32> to vector<7x1xf32>
    %27 = vector.extract_strided_slice %2 {offsets = [4, 0], sizes = [1, 18], strides = [1, 1]} : vector<12x18xf32> to vector<1x18xf32>
    %28 = vector.broadcast %26 : vector<7x1xf32> to vector<7x18xf32>
    %29 = vector.broadcast %27 : vector<1x18xf32> to vector<7x18xf32>
    %30 = arith.mulf %28, %29 : vector<7x18xf32>
    %31 = arith.addf %25, %30 : vector<7x18xf32>
    %32 = vector.extract_strided_slice %0 {offsets = [0, 5], sizes = [7, 1], strides = [1, 1]} : vector<7x12xf32> to vector<7x1xf32>
    %33 = vector.extract_strided_slice %2 {offsets = [5, 0], sizes = [1, 18], strides = [1, 1]} : vector<12x18xf32> to vector<1x18xf32>
    %34 = vector.broadcast %32 : vector<7x1xf32> to vector<7x18xf32>
    %35 = vector.broadcast %33 : vector<1x18xf32> to vector<7x18xf32>
    %36 = arith.mulf %34, %35 : vector<7x18xf32>
    %37 = arith.addf %31, %36 : vector<7x18xf32>
    %38 = vector.extract_strided_slice %0 {offsets = [0, 6], sizes = [7, 1], strides = [1, 1]} : vector<7x12xf32> to vector<7x1xf32>
    %39 = vector.extract_strided_slice %2 {offsets = [6, 0], sizes = [1, 18], strides = [1, 1]} : vector<12x18xf32> to vector<1x18xf32>
    %40 = vector.broadcast %38 : vector<7x1xf32> to vector<7x18xf32>
    %41 = vector.broadcast %39 : vector<1x18xf32> to vector<7x18xf32>
    %42 = arith.mulf %40, %41 : vector<7x18xf32>
    %43 = arith.addf %37, %42 : vector<7x18xf32>
    %44 = vector.extract_strided_slice %0 {offsets = [0, 7], sizes = [7, 1], strides = [1, 1]} : vector<7x12xf32> to vector<7x1xf32>
    %45 = vector.extract_strided_slice %2 {offsets = [7, 0], sizes = [1, 18], strides = [1, 1]} : vector<12x18xf32> to vector<1x18xf32>
    %46 = vector.broadcast %44 : vector<7x1xf32> to vector<7x18xf32>
    %47 = vector.broadcast %45 : vector<1x18xf32> to vector<7x18xf32>
    %48 = arith.mulf %46, %47 : vector<7x18xf32>
    %49 = arith.addf %43, %48 : vector<7x18xf32>
    %50 = vector.extract_strided_slice %0 {offsets = [0, 8], sizes = [7, 1], strides = [1, 1]} : vector<7x12xf32> to vector<7x1xf32>
    %51 = vector.extract_strided_slice %2 {offsets = [8, 0], sizes = [1, 18], strides = [1, 1]} : vector<12x18xf32> to vector<1x18xf32>
    %52 = vector.broadcast %50 : vector<7x1xf32> to vector<7x18xf32>
    %53 = vector.broadcast %51 : vector<1x18xf32> to vector<7x18xf32>
    %54 = arith.mulf %52, %53 : vector<7x18xf32>
    %55 = arith.addf %49, %54 : vector<7x18xf32>
    %56 = vector.extract_strided_slice %0 {offsets = [0, 9], sizes = [7, 1], strides = [1, 1]} : vector<7x12xf32> to vector<7x1xf32>
    %57 = vector.extract_strided_slice %2 {offsets = [9, 0], sizes = [1, 18], strides = [1, 1]} : vector<12x18xf32> to vector<1x18xf32>
    %58 = vector.broadcast %56 : vector<7x1xf32> to vector<7x18xf32>
    %59 = vector.broadcast %57 : vector<1x18xf32> to vector<7x18xf32>
    %60 = arith.mulf %58, %59 : vector<7x18xf32>
    %61 = arith.addf %55, %60 : vector<7x18xf32>
    %62 = vector.extract_strided_slice %0 {offsets = [0, 10], sizes = [7, 1], strides = [1, 1]} : vector<7x12xf32> to vector<7x1xf32>
    %63 = vector.extract_strided_slice %2 {offsets = [10, 0], sizes = [1, 18], strides = [1, 1]} : vector<12x18xf32> to vector<1x18xf32>
    %64 = vector.broadcast %62 : vector<7x1xf32> to vector<7x18xf32>
    %65 = vector.broadcast %63 : vector<1x18xf32> to vector<7x18xf32>
    %66 = arith.mulf %64, %65 : vector<7x18xf32>
    %67 = arith.addf %61, %66 : vector<7x18xf32>
    %68 = vector.extract_strided_slice %0 {offsets = [0, 11], sizes = [7, 1], strides = [1, 1]} : vector<7x12xf32> to vector<7x1xf32>
    %69 = vector.extract_strided_slice %2 {offsets = [11, 0], sizes = [1, 18], strides = [1, 1]} : vector<12x18xf32> to vector<1x18xf32>
    %70 = vector.broadcast %68 : vector<7x1xf32> to vector<7x18xf32>
    %71 = vector.broadcast %69 : vector<1x18xf32> to vector<7x18xf32>
    %72 = arith.mulf %70, %71 : vector<7x18xf32>
    %73 = arith.addf %67, %72 : vector<7x18xf32>
    %74 = vector.extract_strided_slice %1 {offsets = [0, 0], sizes = [1, 1], strides = [1, 1]} : vector<1x4xf32> to vector<1x1xf32>
    %75 = vector.extract_strided_slice %2 {offsets = [0, 0], sizes = [1, 18], strides = [1, 1]} : vector<12x18xf32> to vector<1x18xf32>
    %76 = vector.broadcast %74 : vector<1x1xf32> to vector<1x18xf32>
    %77 = arith.mulf %76, %75 : vector<1x18xf32>
    %78 = vector.extract_strided_slice %1 {offsets = [0, 1], sizes = [1, 1], strides = [1, 1]} : vector<1x4xf32> to vector<1x1xf32>
    %79 = vector.extract_strided_slice %2 {offsets = [1, 0], sizes = [1, 18], strides = [1, 1]} : vector<12x18xf32> to vector<1x18xf32>
    %80 = vector.broadcast %78 : vector<1x1xf32> to vector<1x18xf32>
    %81 = arith.mulf %80, %79 : vector<1x18xf32>
    %82 = arith.addf %77, %81 : vector<1x18xf32>
    %83 = vector.extract_strided_slice %1 {offsets = [0, 2], sizes = [1, 1], strides = [1, 1]} : vector<1x4xf32> to vector<1x1xf32>
    %84 = vector.extract_strided_slice %2 {offsets = [2, 0], sizes = [1, 18], strides = [1, 1]} : vector<12x18xf32> to vector<1x18xf32>
    %85 = vector.broadcast %83 : vector<1x1xf32> to vector<1x18xf32>
    %86 = arith.mulf %85, %84 : vector<1x18xf32>
    %87 = arith.addf %82, %86 : vector<1x18xf32>
    %88 = vector.extract_strided_slice %1 {offsets = [0, 3], sizes = [1, 1], strides = [1, 1]} : vector<1x4xf32> to vector<1x1xf32>
    %89 = vector.extract_strided_slice %2 {offsets = [3, 0], sizes = [1, 18], strides = [1, 1]} : vector<12x18xf32> to vector<1x18xf32>
    %90 = vector.broadcast %88 : vector<1x1xf32> to vector<1x18xf32>
    %91 = arith.mulf %90, %89 : vector<1x18xf32>
    %92 = arith.addf %87, %91 : vector<1x18xf32>
    %93 = tpu.iota {dimensions = array<i32: 1>} : vector<7x2xi32>
    %94 = vector.extract_strided_slice %73 {offsets = [0, 6], sizes = [7, 1], strides = [1, 1]} : vector<7x18xf32> to vector<7x1xf32>
    %95 = vector.extract_strided_slice %73 {offsets = [0, 7], sizes = [7, 1], strides = [1, 1]} : vector<7x18xf32> to vector<7x1xf32>
    %96 = vector.extract_strided_slice %73 {offsets = [0, 8], sizes = [7, 1], strides = [1, 1]} : vector<7x18xf32> to vector<7x1xf32>
    %97 = vector.extract_strided_slice %73 {offsets = [0, 9], sizes = [7, 1], strides = [1, 1]} : vector<7x18xf32> to vector<7x1xf32>
    %98 = vector.extract_strided_slice %73 {offsets = [0, 10], sizes = [7, 1], strides = [1, 1]} : vector<7x18xf32> to vector<7x1xf32>
    %99 = vector.extract_strided_slice %73 {offsets = [0, 11], sizes = [7, 1], strides = [1, 1]} : vector<7x18xf32> to vector<7x1xf32>
    %c0_i32 = arith.constant 0 : i32
    %100 = vector.broadcast %c0_i32 : i32 to vector<7x2xi32>
    %101 = arith.cmpi eq, %93, %100 : vector<7x2xi32>
    %102 = vector.extract_strided_slice %73 {offsets = [0, 12], sizes = [7, 1], strides = [1, 1]} : vector<7x18xf32> to vector<7x1xf32>
    %103 = vector.shape_cast %102 : vector<7x1xf32> to vector<7x1xf32>
    %104 = vector.broadcast %103 : vector<7x1xf32> to vector<7x2xf32>
    %cst = arith.constant 1.000000e+00 : f32
    %105 = vector.broadcast %cst : f32 to vector<7x2xf32>
    %106 = arith.select %101, %104, %105 : vector<7x2xi1>, vector<7x2xf32>
    %c0_i32_5 = arith.constant 0 : i32
    %107 = vector.broadcast %c0_i32_5 : i32 to vector<7x2xi32>
    %108 = arith.cmpi eq, %93, %107 : vector<7x2xi32>
    %109 = vector.extract_strided_slice %73 {offsets = [0, 13], sizes = [7, 1], strides = [1, 1]} : vector<7x18xf32> to vector<7x1xf32>
    %110 = vector.shape_cast %109 : vector<7x1xf32> to vector<7x1xf32>
    %111 = vector.broadcast %110 : vector<7x1xf32> to vector<7x2xf32>
    %cst_6 = arith.constant 1.000000e+00 : f32
    %112 = vector.broadcast %cst_6 : f32 to vector<7x2xf32>
    %113 = arith.select %108, %111, %112 : vector<7x2xi1>, vector<7x2xf32>
    %c0_i32_7 = arith.constant 0 : i32
    %114 = vector.broadcast %c0_i32_7 : i32 to vector<7x2xi32>
    %115 = arith.cmpi eq, %93, %114 : vector<7x2xi32>
    %116 = vector.extract_strided_slice %73 {offsets = [0, 14], sizes = [7, 1], strides = [1, 1]} : vector<7x18xf32> to vector<7x1xf32>
    %117 = vector.shape_cast %116 : vector<7x1xf32> to vector<7x1xf32>
    %118 = vector.broadcast %117 : vector<7x1xf32> to vector<7x2xf32>
    %cst_8 = arith.constant 1.000000e+00 : f32
    %119 = vector.broadcast %cst_8 : f32 to vector<7x2xf32>
    %120 = arith.select %115, %118, %119 : vector<7x2xi1>, vector<7x2xf32>
    %c0_i32_9 = arith.constant 0 : i32
    %121 = vector.broadcast %c0_i32_9 : i32 to vector<7x2xi32>
    %122 = arith.cmpi eq, %93, %121 : vector<7x2xi32>
    %123 = vector.extract_strided_slice %73 {offsets = [0, 15], sizes = [7, 1], strides = [1, 1]} : vector<7x18xf32> to vector<7x1xf32>
    %124 = vector.shape_cast %123 : vector<7x1xf32> to vector<7x1xf32>
    %125 = vector.broadcast %124 : vector<7x1xf32> to vector<7x2xf32>
    %cst_10 = arith.constant 1.000000e+00 : f32
    %126 = vector.broadcast %cst_10 : f32 to vector<7x2xf32>
    %127 = arith.select %122, %125, %126 : vector<7x2xi1>, vector<7x2xf32>
    %c0_i32_11 = arith.constant 0 : i32
    %128 = vector.broadcast %c0_i32_11 : i32 to vector<7x2xi32>
    %129 = arith.cmpi eq, %93, %128 : vector<7x2xi32>
    %130 = vector.extract_strided_slice %73 {offsets = [0, 16], sizes = [7, 1], strides = [1, 1]} : vector<7x18xf32> to vector<7x1xf32>
    %131 = vector.shape_cast %130 : vector<7x1xf32> to vector<7x1xf32>
    %132 = vector.broadcast %131 : vector<7x1xf32> to vector<7x2xf32>
    %cst_12 = arith.constant 1.000000e+00 : f32
    %133 = vector.broadcast %cst_12 : f32 to vector<7x2xf32>
    %134 = arith.select %129, %132, %133 : vector<7x2xi1>, vector<7x2xf32>
    %c0_i32_13 = arith.constant 0 : i32
    %135 = vector.broadcast %c0_i32_13 : i32 to vector<7x2xi32>
    %136 = arith.cmpi eq, %93, %135 : vector<7x2xi32>
    %137 = vector.extract_strided_slice %73 {offsets = [0, 17], sizes = [7, 1], strides = [1, 1]} : vector<7x18xf32> to vector<7x1xf32>
    %138 = vector.shape_cast %137 : vector<7x1xf32> to vector<7x1xf32>
    %139 = vector.broadcast %138 : vector<7x1xf32> to vector<7x2xf32>
    %cst_14 = arith.constant 1.000000e+00 : f32
    %140 = vector.broadcast %cst_14 : f32 to vector<7x2xf32>
    %141 = arith.select %136, %139, %140 : vector<7x2xi1>, vector<7x2xf32>
    %142 = vector.extract_strided_slice %2 {offsets = [4, 0], sizes = [1, 18], strides = [1, 1]} : vector<12x18xf32> to vector<1x18xf32>
    %143 = vector.extract_strided_slice %2 {offsets = [5, 0], sizes = [1, 18], strides = [1, 1]} : vector<12x18xf32> to vector<1x18xf32>
    %144 = vector.extract_strided_slice %2 {offsets = [6, 0], sizes = [1, 18], strides = [1, 1]} : vector<12x18xf32> to vector<1x18xf32>
    %145 = vector.extract_strided_slice %2 {offsets = [7, 0], sizes = [1, 18], strides = [1, 1]} : vector<12x18xf32> to vector<1x18xf32>
    %146 = vector.extract_strided_slice %2 {offsets = [8, 0], sizes = [1, 18], strides = [1, 1]} : vector<12x18xf32> to vector<1x18xf32>
    %c0_15 = arith.constant 0 : index
    %c0_16 = arith.constant 0 : index
    %147 = vector.load %arg3[%c0_15, %c0_16] : memref<8x12xf32, #tpu.memory_space<vmem>>, vector<7x12xf32>
    tpu.vector_store %arg3[%c0_15, %c0_16], %0 {strides = array<i32>} : memref<8x12xf32, #tpu.memory_space<vmem>>, vector<7x12xf32>,
    %c7 = arith.constant 7 : index
    %c0_17 = arith.constant 0 : index
    %148 = vector.load %arg3[%c7, %c0_17] : memref<8x12xf32, #tpu.memory_space<vmem>>, vector<1x4xf32>
    tpu.vector_store %arg3[%c7, %c0_17], %1 {strides = array<i32>} : memref<8x12xf32, #tpu.memory_space<vmem>>, vector<1x4xf32>,
    %cst_18 = arith.constant 0.000000e+00 : f32
    %149 = vector.broadcast %cst_18 : f32 to vector<1x2xf32>
    %c7_19 = arith.constant 7 : index
    %c10 = arith.constant 10 : index
    %150 = vector.load %arg3[%c7_19, %c10] : memref<8x12xf32, #tpu.memory_space<vmem>>, vector<1x2xf32>
    tpu.vector_store %arg3[%c7_19, %c10], %149 {strides = array<i32>} : memref<8x12xf32, #tpu.memory_space<vmem>>, vector<1x2xf32>,
    %151 = vector.extract_strided_slice %92 {offsets = [0, 0], sizes = [1, 1], strides = [1, 1]} : vector<1x18xf32> to vector<1x1xf32>
    %152 = vector.extract_strided_slice %92 {offsets = [0, 6], sizes = [1, 1], strides = [1, 1]} : vector<1x18xf32> to vector<1x1xf32>
    %153 = vector.extract_strided_slice %92 {offsets = [0, 12], sizes = [1, 1], strides = [1, 1]} : vector<1x18xf32> to vector<1x1xf32>
    %154 = vector.broadcast %151 : vector<1x1xf32> to vector<7x1xf32>
    %155 = arith.mulf %154, %94 : vector<7x1xf32>
    %156 = arith.mulf %151, %152 : vector<1x1xf32>
    %cst_20 = arith.constant dense<0xFF800000> : vector<1xf32>
    %157 = vector.multi_reduction <maximumf>, %155, %cst_20 [0] : vector<7x1xf32> to vector<1xf32>
    %158 = vector.shape_cast %157 : vector<1xf32> to vector<1x1xf32>
    %159 = arith.maximumf %158, %156 : vector<1x1xf32>
    %160 = vector.broadcast %159 : vector<1x1xf32> to vector<7x1xf32>
    %161 = arith.subf %155, %160 : vector<7x1xf32>
    %162 = math.exp %161 : vector<7x1xf32>
    %163 = arith.subf %156, %159 : vector<1x1xf32>
    %164 = math.exp %163 : vector<1x1xf32>
    %165 = vector.broadcast %162 : vector<7x1xf32> to vector<7x2xf32>
    %166 = arith.mulf %165, %106 : vector<7x2xf32>
    %cst_21 = arith.constant dense<0.000000e+00> : vector<2xf32>
    %167 = vector.multi_reduction <add>, %166, %cst_21 [0] : vector<7x2xf32> to vector<2xf32>
    %168 = vector.shape_cast %167 : vector<2xf32> to vector<1x2xf32>
    %169 = vector.extract_strided_slice %168 {offsets = [0, 0], sizes = [1, 1], strides = [1, 1]} : vector<1x2xf32> to vector<1x1xf32>
    %170 = arith.mulf %164, %153 : vector<1x1xf32>
    %171 = arith.addf %169, %170 : vector<1x1xf32>
    %172 = vector.extract_strided_slice %168 {offsets = [0, 1], sizes = [1, 1], strides = [1, 1]} : vector<1x2xf32> to vector<1x1xf32>
    %173 = arith.addf %172, %164 : vector<1x1xf32>
    %174 = arith.divf %171, %173 : vector<1x1xf32>
    %175 = math.tanh %174 : vector<1x1xf32>
    %c7_22 = arith.constant 7 : index
    %c4 = arith.constant 4 : index
    %176 = vector.load %arg3[%c7_22, %c4] : memref<8x12xf32, #tpu.memory_space<vmem>>, vector<1x1xf32>
    tpu.vector_store %arg3[%c7_22, %c4], %175 {strides = array<i32>} : memref<8x12xf32, #tpu.memory_space<vmem>>, vector<1x1xf32>,
    %177 = vector.broadcast %175 : vector<1x1xf32> to vector<1x18xf32>
    %178 = arith.mulf %177, %142 : vector<1x18xf32>
    %179 = arith.addf %92, %178 : vector<1x18xf32>
    %180 = vector.extract_strided_slice %179 {offsets = [0, 1], sizes = [1, 1], strides = [1, 1]} : vector<1x18xf32> to vector<1x1xf32>
    %181 = vector.extract_strided_slice %179 {offsets = [0, 7], sizes = [1, 1], strides = [1, 1]} : vector<1x18xf32> to vector<1x1xf32>
    %182 = vector.extract_strided_slice %179 {offsets = [0, 13], sizes = [1, 1], strides = [1, 1]} : vector<1x18xf32> to vector<1x1xf32>
    %183 = vector.broadcast %180 : vector<1x1xf32> to vector<7x1xf32>
    %184 = arith.mulf %183, %95 : vector<7x1xf32>
    %185 = arith.mulf %180, %181 : vector<1x1xf32>
    %cst_23 = arith.constant dense<0xFF800000> : vector<1xf32>
    %186 = vector.multi_reduction <maximumf>, %184, %cst_23 [0] : vector<7x1xf32> to vector<1xf32>
    %187 = vector.shape_cast %186 : vector<1xf32> to vector<1x1xf32>
    %188 = arith.maximumf %187, %185 : vector<1x1xf32>
    %189 = vector.broadcast %188 : vector<1x1xf32> to vector<7x1xf32>
    %190 = arith.subf %184, %189 : vector<7x1xf32>
    %191 = math.exp %190 : vector<7x1xf32>
    %192 = arith.subf %185, %188 : vector<1x1xf32>
    %193 = math.exp %192 : vector<1x1xf32>
    %194 = vector.broadcast %191 : vector<7x1xf32> to vector<7x2xf32>
    %195 = arith.mulf %194, %113 : vector<7x2xf32>
    %cst_24 = arith.constant dense<0.000000e+00> : vector<2xf32>
    %196 = vector.multi_reduction <add>, %195, %cst_24 [0] : vector<7x2xf32> to vector<2xf32>
    %197 = vector.shape_cast %196 : vector<2xf32> to vector<1x2xf32>
    %198 = vector.extract_strided_slice %197 {offsets = [0, 0], sizes = [1, 1], strides = [1, 1]} : vector<1x2xf32> to vector<1x1xf32>
    %199 = arith.mulf %193, %182 : vector<1x1xf32>
    %200 = arith.addf %198, %199 : vector<1x1xf32>
    %201 = vector.extract_strided_slice %197 {offsets = [0, 1], sizes = [1, 1], strides = [1, 1]} : vector<1x2xf32> to vector<1x1xf32>
    %202 = arith.addf %201, %193 : vector<1x1xf32>
    %203 = arith.divf %200, %202 : vector<1x1xf32>
    %204 = math.tanh %203 : vector<1x1xf32>
    %c7_25 = arith.constant 7 : index
    %c5 = arith.constant 5 : index
    %205 = vector.load %arg3[%c7_25, %c5] : memref<8x12xf32, #tpu.memory_space<vmem>>, vector<1x1xf32>
    tpu.vector_store %arg3[%c7_25, %c5], %204 {strides = array<i32>} : memref<8x12xf32, #tpu.memory_space<vmem>>, vector<1x1xf32>,
    %206 = vector.broadcast %204 : vector<1x1xf32> to vector<1x18xf32>
    %207 = arith.mulf %206, %143 : vector<1x18xf32>
    %208 = arith.addf %179, %207 : vector<1x18xf32>
    %209 = vector.extract_strided_slice %208 {offsets = [0, 2], sizes = [1, 1], strides = [1, 1]} : vector<1x18xf32> to vector<1x1xf32>
    %210 = vector.extract_strided_slice %208 {offsets = [0, 8], sizes = [1, 1], strides = [1, 1]} : vector<1x18xf32> to vector<1x1xf32>
    %211 = vector.extract_strided_slice %208 {offsets = [0, 14], sizes = [1, 1], strides = [1, 1]} : vector<1x18xf32> to vector<1x1xf32>
    %212 = vector.broadcast %209 : vector<1x1xf32> to vector<7x1xf32>
    %213 = arith.mulf %212, %96 : vector<7x1xf32>
    %214 = arith.mulf %209, %210 : vector<1x1xf32>
    %cst_26 = arith.constant dense<0xFF800000> : vector<1xf32>
    %215 = vector.multi_reduction <maximumf>, %213, %cst_26 [0] : vector<7x1xf32> to vector<1xf32>
    %216 = vector.shape_cast %215 : vector<1xf32> to vector<1x1xf32>
    %217 = arith.maximumf %216, %214 : vector<1x1xf32>
    %218 = vector.broadcast %217 : vector<1x1xf32> to vector<7x1xf32>
    %219 = arith.subf %213, %218 : vector<7x1xf32>
    %220 = math.exp %219 : vector<7x1xf32>
    %221 = arith.subf %214, %217 : vector<1x1xf32>
    %222 = math.exp %221 : vector<1x1xf32>
    %223 = vector.broadcast %220 : vector<7x1xf32> to vector<7x2xf32>
    %224 = arith.mulf %223, %120 : vector<7x2xf32>
    %cst_27 = arith.constant dense<0.000000e+00> : vector<2xf32>
    %225 = vector.multi_reduction <add>, %224, %cst_27 [0] : vector<7x2xf32> to vector<2xf32>
    %226 = vector.shape_cast %225 : vector<2xf32> to vector<1x2xf32>
    %227 = vector.extract_strided_slice %226 {offsets = [0, 0], sizes = [1, 1], strides = [1, 1]} : vector<1x2xf32> to vector<1x1xf32>
    %228 = arith.mulf %222, %211 : vector<1x1xf32>
    %229 = arith.addf %227, %228 : vector<1x1xf32>
    %230 = vector.extract_strided_slice %226 {offsets = [0, 1], sizes = [1, 1], strides = [1, 1]} : vector<1x2xf32> to vector<1x1xf32>
    %231 = arith.addf %230, %222 : vector<1x1xf32>
    %232 = arith.divf %229, %231 : vector<1x1xf32>
    %233 = math.tanh %232 : vector<1x1xf32>
    %c7_28 = arith.constant 7 : index
    %c6 = arith.constant 6 : index
    %234 = vector.load %arg3[%c7_28, %c6] : memref<8x12xf32, #tpu.memory_space<vmem>>, vector<1x1xf32>
    tpu.vector_store %arg3[%c7_28, %c6], %233 {strides = array<i32>} : memref<8x12xf32, #tpu.memory_space<vmem>>, vector<1x1xf32>,
    %235 = vector.broadcast %233 : vector<1x1xf32> to vector<1x18xf32>
    %236 = arith.mulf %235, %144 : vector<1x18xf32>
    %237 = arith.addf %208, %236 : vector<1x18xf32>
    %238 = vector.extract_strided_slice %237 {offsets = [0, 3], sizes = [1, 1], strides = [1, 1]} : vector<1x18xf32> to vector<1x1xf32>
    %239 = vector.extract_strided_slice %237 {offsets = [0, 9], sizes = [1, 1], strides = [1, 1]} : vector<1x18xf32> to vector<1x1xf32>
    %240 = vector.extract_strided_slice %237 {offsets = [0, 15], sizes = [1, 1], strides = [1, 1]} : vector<1x18xf32> to vector<1x1xf32>
    %241 = vector.broadcast %238 : vector<1x1xf32> to vector<7x1xf32>
    %242 = arith.mulf %241, %97 : vector<7x1xf32>
    %243 = arith.mulf %238, %239 : vector<1x1xf32>
    %cst_29 = arith.constant dense<0xFF800000> : vector<1xf32>
    %244 = vector.multi_reduction <maximumf>, %242, %cst_29 [0] : vector<7x1xf32> to vector<1xf32>
    %245 = vector.shape_cast %244 : vector<1xf32> to vector<1x1xf32>
    %246 = arith.maximumf %245, %243 : vector<1x1xf32>
    %247 = vector.broadcast %246 : vector<1x1xf32> to vector<7x1xf32>
    %248 = arith.subf %242, %247 : vector<7x1xf32>
    %249 = math.exp %248 : vector<7x1xf32>
    %250 = arith.subf %243, %246 : vector<1x1xf32>
    %251 = math.exp %250 : vector<1x1xf32>
    %252 = vector.broadcast %249 : vector<7x1xf32> to vector<7x2xf32>
    %253 = arith.mulf %252, %127 : vector<7x2xf32>
    %cst_30 = arith.constant dense<0.000000e+00> : vector<2xf32>
    %254 = vector.multi_reduction <add>, %253, %cst_30 [0] : vector<7x2xf32> to vector<2xf32>
    %255 = vector.shape_cast %254 : vector<2xf32> to vector<1x2xf32>
    %256 = vector.extract_strided_slice %255 {offsets = [0, 0], sizes = [1, 1], strides = [1, 1]} : vector<1x2xf32> to vector<1x1xf32>
    %257 = arith.mulf %251, %240 : vector<1x1xf32>
    %258 = arith.addf %256, %257 : vector<1x1xf32>
    %259 = vector.extract_strided_slice %255 {offsets = [0, 1], sizes = [1, 1], strides = [1, 1]} : vector<1x2xf32> to vector<1x1xf32>
    %260 = arith.addf %259, %251 : vector<1x1xf32>
    %261 = arith.divf %258, %260 : vector<1x1xf32>
    %262 = math.tanh %261 : vector<1x1xf32>
    %c7_31 = arith.constant 7 : index
    %c7_32 = arith.constant 7 : index
    %263 = vector.load %arg3[%c7_31, %c7_32] : memref<8x12xf32, #tpu.memory_space<vmem>>, vector<1x1xf32>
    tpu.vector_store %arg3[%c7_31, %c7_32], %262 {strides = array<i32>} : memref<8x12xf32, #tpu.memory_space<vmem>>, vector<1x1xf32>,
    %264 = vector.broadcast %262 : vector<1x1xf32> to vector<1x18xf32>
    %265 = arith.mulf %264, %145 : vector<1x18xf32>
    %266 = arith.addf %237, %265 : vector<1x18xf32>
    %267 = vector.extract_strided_slice %266 {offsets = [0, 4], sizes = [1, 1], strides = [1, 1]} : vector<1x18xf32> to vector<1x1xf32>
    %268 = vector.extract_strided_slice %266 {offsets = [0, 10], sizes = [1, 1], strides = [1, 1]} : vector<1x18xf32> to vector<1x1xf32>
    %269 = vector.extract_strided_slice %266 {offsets = [0, 16], sizes = [1, 1], strides = [1, 1]} : vector<1x18xf32> to vector<1x1xf32>
    %270 = vector.broadcast %267 : vector<1x1xf32> to vector<7x1xf32>
    %271 = arith.mulf %270, %98 : vector<7x1xf32>
    %272 = arith.mulf %267, %268 : vector<1x1xf32>
    %cst_33 = arith.constant dense<0xFF800000> : vector<1xf32>
    %273 = vector.multi_reduction <maximumf>, %271, %cst_33 [0] : vector<7x1xf32> to vector<1xf32>
    %274 = vector.shape_cast %273 : vector<1xf32> to vector<1x1xf32>
    %275 = arith.maximumf %274, %272 : vector<1x1xf32>
    %276 = vector.broadcast %275 : vector<1x1xf32> to vector<7x1xf32>
    %277 = arith.subf %271, %276 : vector<7x1xf32>
    %278 = math.exp %277 : vector<7x1xf32>
    %279 = arith.subf %272, %275 : vector<1x1xf32>
    %280 = math.exp %279 : vector<1x1xf32>
    %281 = vector.broadcast %278 : vector<7x1xf32> to vector<7x2xf32>
    %282 = arith.mulf %281, %134 : vector<7x2xf32>
    %cst_34 = arith.constant dense<0.000000e+00> : vector<2xf32>
    %283 = vector.multi_reduction <add>, %282, %cst_34 [0] : vector<7x2xf32> to vector<2xf32>
    %284 = vector.shape_cast %283 : vector<2xf32> to vector<1x2xf32>
    %285 = vector.extract_strided_slice %284 {offsets = [0, 0], sizes = [1, 1], strides = [1, 1]} : vector<1x2xf32> to vector<1x1xf32>
    %286 = arith.mulf %280, %269 : vector<1x1xf32>
    %287 = arith.addf %285, %286 : vector<1x1xf32>
    %288 = vector.extract_strided_slice %284 {offsets = [0, 1], sizes = [1, 1], strides = [1, 1]} : vector<1x2xf32> to vector<1x1xf32>
    %289 = arith.addf %288, %280 : vector<1x1xf32>
    %290 = arith.divf %287, %289 : vector<1x1xf32>
    %291 = math.tanh %290 : vector<1x1xf32>
    %c7_35 = arith.constant 7 : index
    %c8 = arith.constant 8 : index
    %292 = vector.load %arg3[%c7_35, %c8] : memref<8x12xf32, #tpu.memory_space<vmem>>, vector<1x1xf32>
    tpu.vector_store %arg3[%c7_35, %c8], %291 {strides = array<i32>} : memref<8x12xf32, #tpu.memory_space<vmem>>, vector<1x1xf32>,
    %293 = vector.broadcast %291 : vector<1x1xf32> to vector<1x18xf32>
    %294 = arith.mulf %293, %146 : vector<1x18xf32>
    %295 = arith.addf %266, %294 : vector<1x18xf32>
    %296 = vector.extract_strided_slice %295 {offsets = [0, 5], sizes = [1, 1], strides = [1, 1]} : vector<1x18xf32> to vector<1x1xf32>
    %297 = vector.extract_strided_slice %295 {offsets = [0, 11], sizes = [1, 1], strides = [1, 1]} : vector<1x18xf32> to vector<1x1xf32>
    %298 = vector.extract_strided_slice %295 {offsets = [0, 17], sizes = [1, 1], strides = [1, 1]} : vector<1x18xf32> to vector<1x1xf32>
    %299 = vector.broadcast %296 : vector<1x1xf32> to vector<7x1xf32>
    %300 = arith.mulf %299, %99 : vector<7x1xf32>
    %301 = arith.mulf %296, %297 : vector<1x1xf32>
    %cst_36 = arith.constant dense<0xFF800000> : vector<1xf32>
    %302 = vector.multi_reduction <maximumf>, %300, %cst_36 [0] : vector<7x1xf32> to vector<1xf32>
    %303 = vector.shape_cast %302 : vector<1xf32> to vector<1x1xf32>
    %304 = arith.maximumf %303, %301 : vector<1x1xf32>
    %305 = vector.broadcast %304 : vector<1x1xf32> to vector<7x1xf32>
    %306 = arith.subf %300, %305 : vector<7x1xf32>
    %307 = math.exp %306 : vector<7x1xf32>
    %308 = arith.subf %301, %304 : vector<1x1xf32>
    %309 = math.exp %308 : vector<1x1xf32>
    %310 = vector.broadcast %307 : vector<7x1xf32> to vector<7x2xf32>
    %311 = arith.mulf %310, %141 : vector<7x2xf32>
    %cst_37 = arith.constant dense<0.000000e+00> : vector<2xf32>
    %312 = vector.multi_reduction <add>, %311, %cst_37 [0] : vector<7x2xf32> to vector<2xf32>
    %313 = vector.shape_cast %312 : vector<2xf32> to vector<1x2xf32>
    %314 = vector.extract_strided_slice %313 {offsets = [0, 0], sizes = [1, 1], strides = [1, 1]} : vector<1x2xf32> to vector<1x1xf32>
    %315 = arith.mulf %309, %298 : vector<1x1xf32>
    %316 = arith.addf %314, %315 : vector<1x1xf32>
    %317 = vector.extract_strided_slice %313 {offsets = [0, 1], sizes = [1, 1], strides = [1, 1]} : vector<1x2xf32> to vector<1x1xf32>
    %318 = arith.addf %317, %309 : vector<1x1xf32>
    %319 = arith.divf %316, %318 : vector<1x1xf32>
    %320 = math.tanh %319 : vector<1x1xf32>
    %c7_38 = arith.constant 7 : index
    %c9 = arith.constant 9 : index
    %321 = vector.load %arg3[%c7_38, %c9] : memref<8x12xf32, #tpu.memory_space<vmem>>, vector<1x1xf32>
    tpu.vector_store %arg3[%c7_38, %c9], %320 {strides = array<i32>} : memref<8x12xf32, #tpu.memory_space<vmem>>, vector<1x1xf32>,
    return
  }
}

</mosaic_0001>

<llo_original>
// kernel: attention_ne_net_forward.1
$region0: #{attention_ne_net_forward.1}
  #allocation0 [shape = 'u32[]', space=smem, size = 0x4, offset = 0x4, fixed_abs, tag = 'smem constant byte address 0x4 - core index']
  #allocation1 [shape = 'u32[144,128]{1,0:T(1,128)}', space=vmem, size = 0x12000, scoped, tag = 'internal scratch']
  %s0 = inlined_call_operand.vmem [shape: f32[7,12], index: 0, kind: input, shape index: {}]
  %s1 = inlined_call_operand.vmem [shape: f32[1,4], index: 1, kind: input, shape index: {}]
  %s2 = inlined_call_operand.vmem [shape: f32[12,18], index: 2, kind: input, shape index: {}]
  %s3 = inlined_call_operand.vmem [shape: f32[8,12], index: 3, kind: output, shape index: {}]
  %s4 = sld [smem:[#allocation0]]
  $region22: #{attention_ne_net_forward.1} parent=0
    _
  %s6 = ssub.s32 1, %s4
  %s7 = scalar_select 0, %s6, %s4
  // Predicated region
  $region2: #{attention_ne_net_forward.1} parent=0 // pred_check
    _
  $region3: #{attention_ne_net_forward.1} parent=0 // pred_check_branch
    %9 = sbr.rel (0) target = $region5
  $region4: #{attention_ne_net_forward.1} parent=0 // pred_region
    _
  $region5: #{attention_ne_net_forward.1} parent=0 // pred_fallthru
    _
  // Predicated region
  $region6: #{attention_ne_net_forward.1} parent=0 // pred_check
    _
  $region7: #{attention_ne_net_forward.1} parent=0 // pred_check_branch
    %11 = sbr.rel (0) target = $region9
  $region8: #{attention_ne_net_forward.1} parent=0 // pred_region
    _
  $region9: #{attention_ne_net_forward.1} parent=0 // pred_fallthru
    _
  // Predicated region
  $region10: #{attention_ne_net_forward.1} parent=0 // pred_check
    _
  $region11: #{attention_ne_net_forward.1} parent=0 // pred_check_branch
    %13 = sbr.rel (0) target = $region13
  $region12: #{attention_ne_net_forward.1} parent=0 // pred_region
    _
  $region13: #{attention_ne_net_forward.1} parent=0 // pred_fallthru
    _
  %v14 = vld [vmem:[%s0] sm:$0x7f]
  %v15 = vld [vmem:[%s1] sm:$0x1]
  %v16 = vld [vmem:[%s2] sm:$0xff]
  %v17 = vld [vmem:[%s2 + $0x8] sm:$0xf]
  %19 = vset.pattern.permute.xlu0 0
  %20 = vperm.xlu0 %19, %v14
  %v21 = vpop.permute.xlu0 %20
  %v23 = vlaneseq
  %v24 = vshrl.u32 %v23, 7
  %v25 = vsub.s32 0, %v24
  %v26 = vrot.slane %v16, %v25
  %v27 = vmul.f32 %v21, %v26
  %28 = vset.pattern.permute.xlu0 1
  %29 = vperm.xlu0 %28, %v14
  %v30 = vpop.permute.xlu0 %29
  %v32 = vlaneseq
  %v33 = vshrl.u32 %v32, 7
  %v34 = vsub.s32 1, %v33
  %v35 = vrot.slane %v16, %v34
  %v36 = vmul.f32 %v30, %v35
  %v37 = vadd.f32 %v27, %v36
  %38 = vset.pattern.permute.xlu0 2
  %39 = vperm.xlu0 %38, %v14
  %v40 = vpop.permute.xlu0 %39
  %v42 = vlaneseq
  %v43 = vshrl.u32 %v42, 7
  %v44 = vsub.s32 2, %v43
  %v45 = vrot.slane %v16, %v44
  %v46 = vmul.f32 %v40, %v45
  %v47 = vadd.f32 %v37, %v46
  %48 = vset.pattern.permute.xlu0 3
  %49 = vperm.xlu0 %48, %v14
  %v50 = vpop.permute.xlu0 %49
  %v52 = vlaneseq
  %v53 = vshrl.u32 %v52, 7
  %v54 = vsub.s32 3, %v53
  %v55 = vrot.slane %v16, %v54
  %v56 = vmul.f32 %v50, %v55
  %v57 = vadd.f32 %v47, %v56
  %58 = vset.pattern.permute.xlu0 4
  %59 = vperm.xlu0 %58, %v14
  %v60 = vpop.permute.xlu0 %59
  %v62 = vlaneseq
  %v63 = vshrl.u32 %v62, 7
  %v64 = vsub.s32 4, %v63
  %v65 = vrot.slane %v16, %v64
  %v66 = vmul.f32 %v60, %v65
  %v67 = vadd.f32 %v57, %v66
  %68 = vset.pattern.permute.xlu0 5
  %69 = vperm.xlu0 %68, %v14
  %v70 = vpop.permute.xlu0 %69
  %v72 = vlaneseq
  %v73 = vshrl.u32 %v72, 7
  %v74 = vsub.s32 5, %v73
  %v75 = vrot.slane %v16, %v74
  %v76 = vmul.f32 %v70, %v75
  %v77 = vadd.f32 %v67, %v76
  %78 = vset.pattern.permute.xlu0 6
  %79 = vperm.xlu0 %78, %v14
  %v80 = vpop.permute.xlu0 %79
  %v82 = vlaneseq
  %v83 = vshrl.u32 %v82, 7
  %v84 = vsub.s32 6, %v83
  %v85 = vrot.slane %v16, %v84
  %v86 = vmul.f32 %v80, %v85
  %v87 = vadd.f32 %v77, %v86
  %88 = vset.pattern.permute.xlu0 7
  %89 = vperm.xlu0 %88, %v14
  %v90 = vpop.permute.xlu0 %89
  %v92 = vlaneseq
  %v93 = vshrl.u32 %v92, 7
  %v94 = vsub.s32 7, %v93
  %v95 = vrot.slane %v16, %v94
  %v96 = vmul.f32 %v90, %v95
  %v97 = vadd.f32 %v87, %v96
  %98 = vset.pattern.permute.xlu0 8
  %99 = vperm.xlu0 %98, %v14
  %v100 = vpop.permute.xlu0 %99
  %v102 = vlaneseq
  %v103 = vshrl.u32 %v102, 7
  %v104 = vsub.s32 0, %v103
  %v105 = vrot.slane %v17, %v104
  %v106 = vmul.f32 %v100, %v105
  %v107 = vadd.f32 %v97, %v106
  %108 = vset.pattern.permute.xlu0 9
  %109 = vperm.xlu0 %108, %v14
  %v110 = vpop.permute.xlu0 %109
  %v112 = vlaneseq
  %v113 = vshrl.u32 %v112, 7
  %v114 = vsub.s32 1, %v113
  %v115 = vrot.slane %v17, %v114
  %v116 = vmul.f32 %v110, %v115
  %v117 = vadd.f32 %v107, %v116
  %118 = vset.pattern.permute.xlu0 10
  %119 = vperm.xlu0 %118, %v14
  %v120 = vpop.permute.xlu0 %119
  %v122 = vlaneseq
  %v123 = vshrl.u32 %v122, 7
  %v124 = vsub.s32 2, %v123
  %v125 = vrot.slane %v17, %v124
  %v126 = vmul.f32 %v120, %v125
  %v127 = vadd.f32 %v117, %v126
  %128 = vset.pattern.permute.xlu0 11
  %129 = vperm.xlu0 %128, %v14
  %v130 = vpop.permute.xlu0 %129
  %v132 = vlaneseq
  %v133 = vshrl.u32 %v132, 7
  %v134 = vsub.s32 3, %v133
  %v135 = vrot.slane %v17, %v134
  %v136 = vmul.f32 %v130, %v135
  %v137 = vadd.f32 %v127, %v136
  %139 = vset.pattern.permute.xlu0 0
  %140 = vperm.xlu0 %139, %v15
  %v141 = vpop.permute.xlu0 %140
  %v143 = vlaneseq
  %v144 = vshrl.u32 %v143, 7
  %v145 = vsub.s32 0, %v144
  %v146 = vrot.slane %v141, %v145
  %v147 = vmul.f32 %v146, %v16
  %148 = vset.pattern.permute.xlu0 1
  %149 = vperm.xlu0 %148, %v15
  %v150 = vpop.permute.xlu0 %149
  %v152 = vlaneseq
  %v153 = vshrl.u32 %v152, 7
  %v154 = vsub.s32 0, %v153
  %v155 = vrot.slane %v150, %v154
  %v156 = vmul.f32 %v155, %v16
  %v158 = vrot.slane %v156, 1
  %v160 = vadd.f32 %v147, %v158
  %161 = vset.pattern.permute.xlu0 2
  %162 = vperm.xlu0 %161, %v15
  %v163 = vpop.permute.xlu0 %162
  %v165 = vlaneseq
  %v166 = vshrl.u32 %v165, 7
  %v167 = vsub.s32 0, %v166
  %v168 = vrot.slane %v163, %v167
  %v169 = vmul.f32 %v168, %v16
  %v171 = vrot.slane %v169, 2
  %v173 = vadd.f32 %v160, %v171
  %174 = vset.pattern.permute.xlu0 3
  %175 = vperm.xlu0 %174, %v15
  %v176 = vpop.permute.xlu0 %175
  %v178 = vlaneseq
  %v179 = vshrl.u32 %v178, 7
  %v180 = vsub.s32 0, %v179
  %v181 = vrot.slane %v176, %v180
  %v182 = vmul.f32 %v181, %v16
  %v184 = vrot.slane %v182, 3
  %v186 = vadd.f32 %v173, %v184
  %v187 = vlaneseq
  %v188 = vand.u32 %v187, 127
  %vm189 = vcmp.eq.s32.totalorder %v188, 0
  %191 = vset.pattern.permute.xlu0 12
  %192 = vperm.xlu0 %191, %v137
  %v193 = vpop.permute.xlu0 %192
  %v195 = vsel %vm189, %v193, 1.0
  %196 = vset.pattern.permute.xlu0 13
  %197 = vperm.xlu0 %196, %v137
  %v198 = vpop.permute.xlu0 %197
  %v200 = vsel %vm189, %v198, 1.0
  %201 = vset.pattern.permute.xlu0 14
  %202 = vperm.xlu0 %201, %v137
  %v203 = vpop.permute.xlu0 %202
  %v205 = vsel %vm189, %v203, 1.0
  %206 = vset.pattern.permute.xlu0 15
  %207 = vperm.xlu0 %206, %v137
  %v208 = vpop.permute.xlu0 %207
  %v210 = vsel %vm189, %v208, 1.0
  %211 = vset.pattern.permute.xlu0 16
  %212 = vperm.xlu0 %211, %v137
  %v213 = vpop.permute.xlu0 %212
  %v215 = vsel %vm189, %v213, 1.0
  %216 = vset.pattern.permute.xlu0 17
  %217 = vperm.xlu0 %216, %v137
  %v218 = vpop.permute.xlu0 %217
  %v220 = vsel %vm189, %v218, 1.0
  %vm221 = vcmask 96256
  %222 = vst.msk [vmem:[%s3] sm:$0x7f] %vm221, %v14
  %vm223 = vcmask 24576
  %224 = vst.msk [vmem:[%s3 + $0x7] sm:$0x1] %vm223, %v15
  %vm225 = vcmask 90192
  %226 = vst.msk [vmem:[%s3 + $0x7] sm:$0x1] %vm225, 0.0
  %v227 = vlaneseq
  %v228 = vshrl.u32 %v227, 7
  %v229 = vsub.s32 0, %v228
  %v230 = vrot.slane %v186, %v229
  %231 = vrot.lane.b32.xlu0 %v137, 122
  %v232 = vpop.permute.xlu0 %231
  %v234 = vmul.f32 %v230, %v232
  %236 = vrot.lane.b32.xlu0 %v186, 122
  %v237 = vpop.permute.xlu0 %236
  %v239 = vmul.f32 %v186, %v237
  %vm240 = vcmask 6144
  %v241 = vsel %vm240, %v234, -inf
  %v242 = vrot.slane %v241, 4
  %v243 = vmax.f32 %v241, %v242
  %v244 = vrot.slane %v243, 2
  %v245 = vmax.f32 %v243, %v244
  %v246 = vrot.slane %v245, 1
  %v247 = vmax.f32 %v245, %v246
  %v248 = vmax.f32 %v247, %v239
  %v249 = vlaneseq
  %v250 = vshrl.u32 %v249, 7
  %v251 = vsub.s32 0, %v250
  %v252 = vrot.slane %v248, %v251
  %v253 = vsub.f32 %v234, %v252
  %v254 = vmul.f32 %v253, 1.442695
  %v255 = vpow.pop %v254
  %v256 = vsub.f32 %v239, %v248
  %v257 = vmul.f32 %v256, 1.442695
  %v258 = vpow.pop %v257
  %260 = vset.pattern.permute.xlu0 0
  %261 = vperm.xlu0 %260, %v255
  %v262 = vpop.permute.xlu0 %261
  %v264 = vmul.f32 %v262, %v195
  %vm265 = vcmask 14336
  %v266 = vsel %vm265, %v264, 0.0
  %v267 = vrot.slane %v266, 4
  %v268 = vadd.f32 %v266, %v267
  %v269 = vrot.slane %v268, 2
  %v270 = vadd.f32 %v268, %v269
  %v271 = vrot.slane %v270, 1
  %v272 = vadd.f32 %v270, %v271
  %273 = vrot.lane.b32.xlu0 %v186, 116
  %v274 = vpop.permute.xlu0 %273
  %v276 = vmul.f32 %v258, %v274
  %v277 = vadd.f32 %v272, %v276
  %279 = vrot.lane.b32.xlu0 %v258, 1
  %v280 = vpop.permute.xlu0 %279
  %v282 = vadd.f32 %v272, %v280
  %284 = vrot.lane.b32.xlu0 %v282, 127
  %v285 = vpop.permute.xlu0 %284
  %v287 = vrcp.pop %v285
  %v288 = vmul.f32 %v277, %v287
  %v289 = vtanh.pop %v288
  %291 = vrot.lane.b32.xlu0 %v289, 4
  %v292 = vpop.permute.xlu0 %291
  %vm294 = vcmask 32800
  %295 = vst.msk [vmem:[%s3 + $0x7] sm:$0x1] %vm294, %v292
  %296 = vset.pattern.permute.xlu0 0
  %297 = vperm.xlu0 %296, %v289
  %v298 = vpop.permute.xlu0 %297
  %v301 = vrot.slane %v16, 4
  %v303 = vmul.f32 %v298, %v301
  %v304 = vadd.f32 %v186, %v303
  %v305 = vlaneseq
  %v306 = vshrl.u32 %v305, 7
  %v307 = vsub.s32 0, %v306
  %v308 = vrot.slane %v304, %v307
  %v309 = vmul.f32 %v308, %v232
  %311 = vrot.lane.b32.xlu0 %v304, 122
  %v312 = vpop.permute.xlu0 %311
  %v314 = vmul.f32 %v304, %v312
  %vm315 = vcmask 14344
  %v316 = vsel %vm315, %v309, -inf
  %v317 = vrot.slane %v316, 4
  %v318 = vmax.f32 %v316, %v317
  %v319 = vrot.slane %v318, 2
  %v320 = vmax.f32 %v318, %v319
  %v321 = vrot.slane %v320, 1
  %v322 = vmax.f32 %v320, %v321
  %v323 = vmax.f32 %v322, %v314
  %v324 = vlaneseq
  %v325 = vshrl.u32 %v324, 7
  %v326 = vsub.s32 0, %v325
  %v327 = vrot.slane %v323, %v326
  %v328 = vsub.f32 %v309, %v327
  %v329 = vmul.f32 %v328, 1.442695
  %v330 = vpow.pop %v329
  %v331 = vsub.f32 %v314, %v323
  %v332 = vmul.f32 %v331, 1.442695
  %v333 = vpow.pop %v332
  %335 = vset.pattern.permute.xlu0 1
  %336 = vperm.xlu0 %335, %v330
  %v337 = vpop.permute.xlu0 %336
  %v339 = vmul.f32 %v337, %v200
  %v340 = vsel %vm265, %v339, 0.0
  %v341 = vrot.slane %v340, 4
  %v342 = vadd.f32 %v340, %v341
  %v343 = vrot.slane %v342, 2
  %v344 = vadd.f32 %v342, %v343
  %v345 = vrot.slane %v344, 1
  %v346 = vadd.f32 %v344, %v345
  %347 = vrot.lane.b32.xlu0 %v304, 116
  %v348 = vpop.permute.xlu0 %347
  %v350 = vmul.f32 %v333, %v348
  %352 = vrot.lane.b32.xlu0 %v350, 127
  %v353 = vpop.permute.xlu0 %352
  %v355 = vadd.f32 %v346, %v353
  %v356 = vadd.f32 %v346, %v333
  %358 = vrot.lane.b32.xlu0 %v356, 127
  %v359 = vpop.permute.xlu0 %358
  %v361 = vrcp.pop %v359
  %v362 = vmul.f32 %v355, %v361
  %v363 = vtanh.pop %v362
  %365 = vrot.lane.b32.xlu0 %v363, 5
  %v366 = vpop.permute.xlu0 %365
  %vm368 = vcmask 41000
  %369 = vst.msk [vmem:[%s3 + $0x7] sm:$0x1] %vm368, %v366
  %370 = vset.pattern.permute.xlu0 0
  %371 = vperm.xlu0 %370, %v363
  %v372 = vpop.permute.xlu0 %371
  %v374 = vrot.slane %v16, 5
  %v376 = vmul.f32 %v372, %v374
  %v377 = vadd.f32 %v304, %v376
  %v378 = vlaneseq
  %v379 = vshrl.u32 %v378, 7
  %v380 = vsub.s32 0, %v379
  %v381 = vrot.slane %v377, %v380
  %v382 = vmul.f32 %v381, %v232
  %384 = vrot.lane.b32.xlu0 %v377, 122
  %v385 = vpop.permute.xlu0 %384
  %v387 = vmul.f32 %v377, %v385
  %vm388 = vcmask 22544
  %v389 = vsel %vm388, %v382, -inf
  %v390 = vrot.slane %v389, 4
  %v391 = vmax.f32 %v389, %v390
  %v392 = vrot.slane %v391, 2
  %v393 = vmax.f32 %v391, %v392
  %v394 = vrot.slane %v393, 1
  %v395 = vmax.f32 %v393, %v394
  %v396 = vmax.f32 %v395, %v387
  %v397 = vlaneseq
  %v398 = vshrl.u32 %v397, 7
  %v399 = vsub.s32 0, %v398
  %v400 = vrot.slane %v396, %v399
  %v401 = vsub.f32 %v382, %v400
  %v402 = vmul.f32 %v401, 1.442695
  %v403 = vpow.pop %v402
  %v404 = vsub.f32 %v387, %v396
  %v405 = vmul.f32 %v404, 1.442695
  %v406 = vpow.pop %v405
  %408 = vset.pattern.permute.xlu0 2
  %409 = vperm.xlu0 %408, %v403
  %v410 = vpop.permute.xlu0 %409
  %v412 = vmul.f32 %v410, %v205
  %v413 = vsel %vm265, %v412, 0.0
  %v414 = vrot.slane %v413, 4
  %v415 = vadd.f32 %v413, %v414
  %v416 = vrot.slane %v415, 2
  %v417 = vadd.f32 %v415, %v416
  %v418 = vrot.slane %v417, 1
  %v419 = vadd.f32 %v417, %v418
  %420 = vrot.lane.b32.xlu0 %v377, 116
  %v421 = vpop.permute.xlu0 %420
  %v423 = vmul.f32 %v406, %v421
  %425 = vrot.lane.b32.xlu0 %v423, 126
  %v426 = vpop.permute.xlu0 %425
  %v428 = vadd.f32 %v419, %v426
  %430 = vrot.lane.b32.xlu0 %v406, 127
  %v431 = vpop.permute.xlu0 %430
  %v433 = vadd.f32 %v419, %v431
  %435 = vrot.lane.b32.xlu0 %v433, 127
  %v436 = vpop.permute.xlu0 %435
  %v438 = vrcp.pop %v436
  %v439 = vmul.f32 %v428, %v438
  %v440 = vtanh.pop %v439
  %442 = vrot.lane.b32.xlu0 %v440, 6
  %v443 = vpop.permute.xlu0 %442
  %vm445 = vcmask 49200
  %446 = vst.msk [vmem:[%s3 + $0x7] sm:$0x1] %vm445, %v443
  %447 = vset.pattern.permute.xlu0 0
  %448 = vperm.xlu0 %447, %v440
  %v449 = vpop.permute.xlu0 %448
  %v451 = vrot.slane %v16, 6
  %v453 = vmul.f32 %v449, %v451
  %v454 = vadd.f32 %v377, %v453
  %v455 = vlaneseq
  %v456 = vshrl.u32 %v455, 7
  %v457 = vsub.s32 0, %v456
  %v458 = vrot.slane %v454, %v457
  %v459 = vmul.f32 %v458, %v232
  %461 = vrot.lane.b32.xlu0 %v454, 122
  %v462 = vpop.permute.xlu0 %461
  %v464 = vmul.f32 %v454, %v462
  %vm465 = vcmask 30744
  %v466 = vsel %vm465, %v459, -inf
  %v467 = vrot.slane %v466, 4
  %v468 = vmax.f32 %v466, %v467
  %v469 = vrot.slane %v468, 2
  %v470 = vmax.f32 %v468, %v469
  %v471 = vrot.slane %v470, 1
  %v472 = vmax.f32 %v470, %v471
  %v473 = vmax.f32 %v472, %v464
  %v474 = vlaneseq
  %v475 = vshrl.u32 %v474, 7
  %v476 = vsub.s32 0, %v475
  %v477 = vrot.slane %v473, %v476
  %v478 = vsub.f32 %v459, %v477
  %v479 = vmul.f32 %v478, 1.442695
  %v480 = vpow.pop %v479
  %v481 = vsub.f32 %v464, %v473
  %v482 = vmul.f32 %v481, 1.442695
  %v483 = vpow.pop %v482
  %485 = vset.pattern.permute.xlu0 3
  %486 = vperm.xlu0 %485, %v480
  %v487 = vpop.permute.xlu0 %486
  %v489 = vmul.f32 %v487, %v210
  %v490 = vsel %vm265, %v489, 0.0
  %v491 = vrot.slane %v490, 4
  %v492 = vadd.f32 %v490, %v491
  %v493 = vrot.slane %v492, 2
  %v494 = vadd.f32 %v492, %v493
  %v495 = vrot.slane %v494, 1
  %v496 = vadd.f32 %v494, %v495
  %497 = vrot.lane.b32.xlu0 %v454, 116
  %v498 = vpop.permute.xlu0 %497
  %v500 = vmul.f32 %v483, %v498
  %502 = vrot.lane.b32.xlu0 %v500, 125
  %v503 = vpop.permute.xlu0 %502
  %v505 = vadd.f32 %v496, %v503
  %507 = vrot.lane.b32.xlu0 %v483, 126
  %v508 = vpop.permute.xlu0 %507
  %v510 = vadd.f32 %v496, %v508
  %512 = vrot.lane.b32.xlu0 %v510, 127
  %v513 = vpop.permute.xlu0 %512
  %v515 = vrcp.pop %v513
  %v516 = vmul.f32 %v505, %v515
  %v517 = vtanh.pop %v516
  %519 = vrot.lane.b32.xlu0 %v517, 7
  %v520 = vpop.permute.xlu0 %519
  %vm522 = vcmask 57400
  %523 = vst.msk [vmem:[%s3 + $0x7] sm:$0x1] %vm522, %v520
  %524 = vset.pattern.permute.xlu0 0
  %525 = vperm.xlu0 %524, %v517
  %v526 = vpop.permute.xlu0 %525
  %v528 = vrot.slane %v16, 7
  %v530 = vmul.f32 %v526, %v528
  %v531 = vadd.f32 %v454, %v530
  %v532 = vlaneseq
  %v533 = vshrl.u32 %v532, 7
  %v534 = vsub.s32 0, %v533
  %v535 = vrot.slane %v531, %v534
  %v536 = vmul.f32 %v535, %v232
  %538 = vrot.lane.b32.xlu0 %v531, 122
  %v539 = vpop.permute.xlu0 %538
  %v541 = vmul.f32 %v531, %v539
  %vm542 = vcmask 38944
  %v543 = vsel %vm542, %v536, -inf
  %v544 = vrot.slane %v543, 4
  %v545 = vmax.f32 %v543, %v544
  %v546 = vrot.slane %v545, 2
  %v547 = vmax.f32 %v545, %v546
  %v548 = vrot.slane %v547, 1
  %v549 = vmax.f32 %v547, %v548
  %v550 = vmax.f32 %v549, %v541
  %v551 = vlaneseq
  %v552 = vshrl.u32 %v551, 7
  %v553 = vsub.s32 0, %v552
  %v554 = vrot.slane %v550, %v553
  %v555 = vsub.f32 %v536, %v554
  %v556 = vmul.f32 %v555, 1.442695
  %v557 = vpow.pop %v556
  %v558 = vsub.f32 %v541, %v550
  %v559 = vmul.f32 %v558, 1.442695
  %v560 = vpow.pop %v559
  %562 = vset.pattern.permute.xlu0 4
  %563 = vperm.xlu0 %562, %v557
  %v564 = vpop.permute.xlu0 %563
  %v566 = vmul.f32 %v564, %v215
  %v567 = vsel %vm265, %v566, 0.0
  %v568 = vrot.slane %v567, 4
  %v569 = vadd.f32 %v567, %v568
  %v570 = vrot.slane %v569, 2
  %v571 = vadd.f32 %v569, %v570
  %v572 = vrot.slane %v571, 1
  %v573 = vadd.f32 %v571, %v572
  %574 = vrot.lane.b32.xlu0 %v531, 116
  %v575 = vpop.permute.xlu0 %574
  %v577 = vmul.f32 %v560, %v575
  %579 = vrot.lane.b32.xlu0 %v577, 124
  %v580 = vpop.permute.xlu0 %579
  %v582 = vadd.f32 %v573, %v580
  %584 = vrot.lane.b32.xlu0 %v560, 125
  %v585 = vpop.permute.xlu0 %584
  %v587 = vadd.f32 %v573, %v585
  %589 = vrot.lane.b32.xlu0 %v587, 127
  %v590 = vpop.permute.xlu0 %589
  %v592 = vrcp.pop %v590
  %v593 = vmul.f32 %v582, %v592
  %v594 = vtanh.pop %v593
  %596 = vrot.lane.b32.xlu0 %v594, 8
  %v597 = vpop.permute.xlu0 %596
  %vm599 = vcmask 65600
  %600 = vst.msk [vmem:[%s3 + $0x7] sm:$0x1] %vm599, %v597
  %601 = vset.pattern.permute.xlu0 0
  %602 = vperm.xlu0 %601, %v594
  %v603 = vpop.permute.xlu0 %602
  %v605 = vmul.f32 %v603, %v17
  %v606 = vadd.f32 %v531, %v605
  %v607 = vlaneseq
  %v608 = vshrl.u32 %v607, 7
  %v609 = vsub.s32 0, %v608
  %v610 = vrot.slane %v606, %v609
  %v611 = vmul.f32 %v610, %v232
  %613 = vrot.lane.b32.xlu0 %v606, 122
  %v614 = vpop.permute.xlu0 %613
  %v616 = vmul.f32 %v606, %v614
  %vm617 = vcmask 47144
  %v618 = vsel %vm617, %v611, -inf
  %v619 = vrot.slane %v618, 4
  %v620 = vmax.f32 %v618, %v619
  %v621 = vrot.slane %v620, 2
  %v622 = vmax.f32 %v620, %v621
  %v623 = vrot.slane %v622, 1
  %v624 = vmax.f32 %v622, %v623
  %v625 = vmax.f32 %v624, %v616
  %v626 = vlaneseq
  %v627 = vshrl.u32 %v626, 7
  %v628 = vsub.s32 0, %v627
  %v629 = vrot.slane %v625, %v628
  %v630 = vsub.f32 %v611, %v629
  %v631 = vmul.f32 %v630, 1.442695
  %v632 = vpow.pop %v631
  %v633 = vsub.f32 %v616, %v625
  %v634 = vmul.f32 %v633, 1.442695
  %v635 = vpow.pop %v634
  %637 = vset.pattern.permute.xlu0 5
  %638 = vperm.xlu0 %637, %v632
  %v639 = vpop.permute.xlu0 %638
  %v641 = vmul.f32 %v639, %v220
  %v642 = vsel %vm265, %v641, 0.0
  %v643 = vrot.slane %v642, 4
  %v644 = vadd.f32 %v642, %v643
  %v645 = vrot.slane %v644, 2
  %v646 = vadd.f32 %v644, %v645
  %v647 = vrot.slane %v646, 1
  %v648 = vadd.f32 %v646, %v647
  %649 = vrot.lane.b32.xlu0 %v606, 116
  %v650 = vpop.permute.xlu0 %649
  %v652 = vmul.f32 %v635, %v650
  %654 = vrot.lane.b32.xlu0 %v652, 123
  %v655 = vpop.permute.xlu0 %654
  %v657 = vadd.f32 %v648, %v655
  %659 = vrot.lane.b32.xlu0 %v635, 124
  %v660 = vpop.permute.xlu0 %659
  %v662 = vadd.f32 %v648, %v660
  %664 = vrot.lane.b32.xlu0 %v662, 127
  %v665 = vpop.permute.xlu0 %664
  %v667 = vrcp.pop %v665
  %v668 = vmul.f32 %v657, %v667
  %v669 = vtanh.pop %v668
  %671 = vrot.lane.b32.xlu0 %v669, 9
  %v672 = vpop.permute.xlu0 %671
  %vm674 = vcmask 73800
  %675 = vst.msk [vmem:[%s3 + $0x7] sm:$0x1] %vm674, %v672
  // Predicated region
  $region14: #{attention_ne_net_forward.1} parent=0 // pred_check
    _
  $region15: #{attention_ne_net_forward.1} parent=0 // pred_check_branch
    %677 = sbr.rel (0) target = $region17
  $region16: #{attention_ne_net_forward.1} parent=0 // pred_region
    _
  $region17: #{attention_ne_net_forward.1} parent=0 // pred_fallthru
    _
  // Predicated region
  $region18: #{attention_ne_net_forward.1} parent=0 // pred_check
    _
  $region19: #{attention_ne_net_forward.1} parent=0 // pred_check_branch
    %679 = sbr.rel (0) target = $region21
  $region20: #{attention_ne_net_forward.1} parent=0 // pred_region
    _
  $region21: #{attention_ne_net_forward.1} parent=0 // pred_fallthru
    _

</llo_original>
